<compile_context>
chip_gen: v7x
topology: tpu7x:2x2x1
jax: 0.10.0
libtpu: 0.0.40
codegen_flags: <defaults>
</compile_context>

<pallas_src>
import math

import jax
import jax.numpy as jnp
from jax.experimental import pallas as pl
from jax.experimental.pallas import tpu as pltpu


def _copy_kernel(x_ref, o_ref):
    # Straight dense tile copy; no elementwise work (HBM/DMA-bound).
    o_ref[...] = x_ref[...]


_LANE = 128
_MAX_Q = 4096                      # slab lane width cap (multiple of 128)
_TARGET_BLOCK_BYTES = 4 << 20      # ~4 MiB per block
_VMEM_LIMIT_BYTES = 32 << 20       # explicit: v5e's scoped default is only 16 MiB


def _sublane_multiple(itemsize: int) -> int:
    """Packed-dtype native sublane tile: f32 -> 8, bf16 -> 16, int8/fp8 -> 32."""
    return max(8, (8 * 4) // max(itemsize, 1))


def _round_down(x: int, m: int) -> int:
    return (x // m) * m


def _flat_slab(total: int) -> tuple[int, int] | None:
    """Factor total = R * Q with Q the largest multiple of 128 <= _MAX_Q dividing total."""
    if total % _LANE != 0:
        return None
    q = _LANE
    cand = _round_down(_MAX_Q, _LANE)
    while cand >= _LANE:
        if total % cand == 0:
            q = cand
            break
        cand -= _LANE
    return total // q, q


def _row_tile(r: int, q: int, itemsize: int) -> int:
    """Rows per block: ~_TARGET_BLOCK_BYTES, dtype-aware sublane multiple (or full R)."""
    sub = _sublane_multiple(itemsize)
    target_rows = max(1, (_TARGET_BLOCK_BYTES // itemsize) // max(q, 1))
    if r <= target_rows:
        return r                      # full extent -> always a legal block dim
    tr = max(sub, _round_down(target_rows, sub))
    return min(tr, r)


def _choose_2d_tiles(n: int, d: int, itemsize: int) -> tuple[int, int]:
    """Fallback (N, D) tiling when N*D is not a multiple of 128."""
    sub = _sublane_multiple(itemsize)
    max_td = 2048
    if d <= max_td:
        td = d                        # full extent -> legal even if not 128-aligned
    else:
        td = max_td
        for cand in range(_round_down(max_td, _LANE), _LANE - 1, -_LANE):
            if d % cand == 0:         # avoid ragged column tail when possible
                td = cand
                break
    target_elems = max(1, _TARGET_BLOCK_BYTES // itemsize)
    tr_target = max(sub, _round_down(target_elems // max(td, 1), sub))
    tr = n if n <= tr_target else tr_target
    return tr, td


def flatten(x: jax.Array, materialize: bool = True) -> jax.Array:
    """Equivalent of torch `x.reshape(x.size(0), -1)` for any-rank input.

    materialize=False is the fastest path: reshape is metadata-only, no HBM
    traffic, no kernel.  materialize=True runs a lane-dense tiled Pallas copy.
    """
    n = x.shape[0]
    d = math.prod(x.shape[1:]) if x.ndim > 1 else 1

    # Row-major collapse (metadata only, matches PyTorch reshape semantics).
    x2d = jnp.reshape(x, (n, d))

    if not materialize or n == 0 or d == 0:
        return x2d

    itemsize = jnp.dtype(x.dtype).itemsize
    total = n * d
    slab = _flat_slab(total)

    if slab is not None:
        # Lane-dense flat-slab copy: (R, Q) view of the same row-major buffer.
        r, q = slab
        tr = _row_tile(r, q, itemsize)
        out = pl.pallas_call(
            _copy_kernel,
            out_shape=jax.ShapeDtypeStruct((r, q), x.dtype),
            grid_spec=pltpu.PrefetchScalarGridSpec(
                num_scalar_prefetch=0,
                grid=(pl.cdiv(r, tr),),
                in_specs=[pl.BlockSpec((tr, q), lambda i: (i, 0))],
                out_specs=pl.BlockSpec((tr, q), lambda i: (i, 0)),
            ),
            compiler_params=pltpu.CompilerParams(
                dimension_semantics=("parallel",),
                vmem_limit_bytes=_VMEM_LIMIT_BYTES,
            ),
        )(jnp.reshape(x2d, (r, q)))
        return jnp.reshape(out, (n, d))

    # Fallback: N*D not a multiple of 128 -> tile the logical (N, D) view.
    tr, td = _choose_2d_tiles(n, d, itemsize)
    out = pl.pallas_call(
        _copy_kernel,
        out_shape=jax.ShapeDtypeStruct((n, d), x.dtype),
        grid_spec=pltpu.PrefetchScalarGridSpec(
            num_scalar_prefetch=0,
            grid=(pl.cdiv(n, tr), pl.cdiv(d, td)),
            in_specs=[pl.BlockSpec((tr, td), lambda i, j: (i, j))],
            out_specs=pl.BlockSpec((tr, td), lambda i, j: (i, j)),
        ),
        compiler_params=pltpu.CompilerParams(
            dimension_semantics=("parallel", "parallel"),
            vmem_limit_bytes=_VMEM_LIMIT_BYTES,
        ),
    )(x2d)
    return out


if __name__ == "__main__":
    key = jax.random.PRNGKey(0)
    # Small NCHW input consistent with a conv-style feature map.
    x = jax.random.normal(key, (2, 4, 16, 16), dtype=jnp.float32)

    # Reference: pure-JAX flatten (identical to torch reshape(N, -1)).
    y_ref = jnp.reshape(x, (x.shape[0], -1))

    # Materializing Pallas copy path.
    y = jax.block_until_ready(flatten(x))
    assert y.shape == (2, 4 * 16 * 16), y.shape
    assert y.dtype == x.dtype
    assert bool(jnp.array_equal(y, y_ref))

    # Metadata-only fast path (no kernel, zero HBM traffic).
    y_fast = jax.block_until_ready(flatten(x, materialize=False))
    assert bool(jnp.array_equal(y_fast, y_ref))

    print("KERNEL_OK")
</pallas_src>

<mosaic_0001>
module attributes {stable_mosaic.version = 11 : i64} {
  func.func @_copy_kernel(%arg0: i32, %arg1: memref<1x2048xf32, #tpu.memory_space<vmem>>, %arg2: memref<1x2048xf32, #tpu.memory_space<vmem>>) attributes {dimension_semantics = [#tpu.dimension_semantics<parallel>], iteration_bounds = array<i64: 1>, scalar_prefetch = 0 : i64, scratch_operands = 0 : i64, tpu.core_type = #tpu.core_type<tc>, window_params = [{transform_indices = @transform_0, window_bounds = array<i64: 1, 2048>}, {transform_indices = @transform_1, window_bounds = array<i64: 1, 2048>}]} {
    %c0 = arith.constant 0 : index
    %c0_0 = arith.constant 0 : index
    %0 = vector.load %arg1[%c0, %c0_0] : memref<1x2048xf32, #tpu.memory_space<vmem>>, vector<1x2048xf32>
    %c0_1 = arith.constant 0 : index
    %c0_2 = arith.constant 0 : index
    %1 = vector.load %arg2[%c0_1, %c0_2] : memref<1x2048xf32, #tpu.memory_space<vmem>>, vector<1x2048xf32>
    tpu.vector_store %arg2[%c0_1, %c0_2], %0 {strides = array<i32>} : memref<1x2048xf32, #tpu.memory_space<vmem>>, vector<1x2048xf32>,
    return
  }
  func.func @transform_0(%arg0: i32) -> (i32, i32) {
    %c0_i32 = arith.constant 0 : i32
    %c0_i32_0 = arith.constant 0 : i32
    return %arg0, %c0_i32 : i32, i32
  }
  func.func @transform_1(%arg0: i32) -> (i32, i32) {
    %c0_i32 = arith.constant 0 : i32
    %c0_i32_0 = arith.constant 0 : i32
    return %arg0, %c0_i32 : i32, i32
  }
}

</mosaic_0001>

<llo_original>
// kernel: tpu_custom_call.1
$region0: #{tpu_custom_call.1}
  #allocation0 [shape = 'u32[]', space=smem, size = 0x4, offset = 0x4, fixed_abs, tag = 'smem constant byte address 0x4 - core index']
  #allocation1 [shape = 'u32[144,128]{1,0:T(1,128)}', space=vmem, size = 0x12000, scoped, tag = 'internal scratch']
  %s0 = inlined_call_operand.hbm [shape: f32[1,2048], index: 0, kind: input, shape index: {}]
  %s1 = inlined_call_operand.hbm [shape: f32[1,2048], index: 1, kind: output, shape index: {}]
  %s2 = sld [smem:[#allocation0]]
  $region18: #{tpu_custom_call.1} parent=0
    _
  %s4 = ssub.s32 1, %s2
  %s5 = scalar_select 0, %s4, %s2
  $region1: #{tpu_custom_call.1} parent=0
    #allocation2 [shape = 'u8[8192]{0}', space=vmem, size = 0x2000, scoped, tag = 'input window, operand 0, single buffered']
    #allocation3 [shape = 's32[1]{0}', space=sflag, size = 0x4, scoped, tag = 'scoped memory for tpu_custom_call.1']
    #allocation4 [shape = 's32[1]{0}', space=sflag, size = 0x4, scoped, tag = 'scoped memory for tpu_custom_call.1']
    #allocation5 [shape = 'u8[8192]{0}', space=vmem, size = 0x2000, scoped, tag = 'output window, operand 0, single buffered']
    %6 = vsyncpa [#allocation3], 0
    %7 = vsyncpa [#allocation4], 0
    // Predicated region
    $region2: #{tpu_custom_call.1} parent=1 // pred_check
      _
    $region3: #{tpu_custom_call.1} parent=1 // pred_check_branch
      %9 = sbr.rel (0) target = $region5
    $region4: #{tpu_custom_call.1} parent=1 // pred_region
      %s11 = ssub.s32 256, 256
      %12 = vsyncadd [#allocation3], %s11
      %s14 = sshll.u32 [#allocation2], 4
      %s15 = int_to_ptr.vmem [resolvable:$true] %s14
      %17 = dma.hbm_to_vmem [thread:$0]  %s0, 256, %s15, [#allocation3]
    $region5: #{tpu_custom_call.1} parent=1 // pred_fallthru
      _
    // Predicated region
    $region6: #{tpu_custom_call.1} parent=1 // pred_check
      _
    $region7: #{tpu_custom_call.1} parent=1 // pred_check_branch
      %19 = sbr.rel (0) target = $region9
    $region8: #{tpu_custom_call.1} parent=1 // pred_region
      %20 = dma.done [#allocation3], 256
    $region9: #{tpu_custom_call.1} parent=1 // pred_fallthru
      _
    %v21 = vld [vmem:[#allocation2] sm:$0xff]
    %v22 = vld [vmem:[#allocation2 + $0x8] sm:$0xff]
    %23 = vst [vmem:[#allocation5] sm:$0xff] %v21
    %24 = vst [vmem:[#allocation5 + $0x8] sm:$0xff] %v22
    // Predicated region
    $region10: #{tpu_custom_call.1} parent=1 // pred_check
      _
    $region11: #{tpu_custom_call.1} parent=1 // pred_check_branch
      %26 = sbr.rel (0) target = $region13
    $region12: #{tpu_custom_call.1} parent=1 // pred_region
      %s28 = ssub.s32 256, 256
      %29 = vsyncadd [#allocation4], %s28
      %s31 = sshll.u32 [#allocation5], 4
      %s32 = int_to_ptr.vmem [resolvable:$true] %s31
      %34 = dma.vmem_to_hbm [thread:$0]  %s32, 256, %s1, [#allocation4]
    $region13: #{tpu_custom_call.1} parent=1 // pred_fallthru
      _
    // Predicated region
    $region14: #{tpu_custom_call.1} parent=1 // pred_check
      _
    $region15: #{tpu_custom_call.1} parent=1 // pred_check_branch
      %36 = sbr.rel (0) target = $region17
    $region16: #{tpu_custom_call.1} parent=1 // pred_region
      %37 = dma.done [#allocation4], 256
    $region17: #{tpu_custom_call.1} parent=1 // pred_fallthru
      _
    %38 = vsyncpa [#allocation3], 1
    %39 = vsyncpa [#allocation4], 1

</llo_original>
